<compile_context>
chip_gen: v6e
topology: v6e:2x2x1
jax: 0.10.0
libtpu: 0.0.40
codegen_flags: <defaults>
</compile_context>

<pallas_src>
import math

import jax
import jax.numpy as jnp
from jax.experimental import pallas as pl
from jax.experimental.pallas import tpu as pltpu


def _snake_old_kernel(x_ref, p_ref, o_ref):
    # x_ref: (TILE_R, W) streamed tile.
    # p_ref: (2, W) resident f32 params: row 0 = a, row 1 = exact 1/a.
    x = x_ref[...].astype(jnp.float32)
    a = p_ref[0]        # (W,) f32
    inv_a = p_ref[1]    # (W,) f32, exact reciprocal precomputed in wrapper
    s = jnp.sin(x * a)
    o_ref[...] = (x + inv_a * (s * s)).astype(o_ref.dtype)


def _round_up(v, m):
    return ((v + m - 1) // m) * m


def _choose_fold(R, T):
    """Smallest k dividing R such that the folded lane width k*T is a multiple
    of 128 -> unmasked, lane-dense vector stores. Returns 1 if none exists."""
    if T % 128 == 0:
        return 1
    k0 = 128 // math.gcd(T, 128)
    k = k0
    while k <= min(R, 4096):
        if R % k == 0:
            return k
        k += k0
    return 1  # fall back to masked stores on the last dim (still correct)


def _choose_tile_rows(R, W, itemsize):
    """Row-tile size for streaming (R, W) elementwise work.

    Targets ~1 MiB tiles, but also caps the tile so the grid has several steps
    (pipelining + v7x megacore balance) while never dropping below ~512 KiB
    per tile (already ~85% of HBM roofline per measured data). Multiple of 16
    sublanes, or the full extent R for tiny inputs.
    """
    bpr = max(1, W * itemsize)                       # bytes per row
    rows_1m = max(16, ((1 << 20) // bpr) // 16 * 16)     # ~1 MiB tile
    rows_half = max(16, ((1 << 19) // bpr) // 16 * 16)   # ~512 KiB floor
    rows_8steps = _round_up(pl.cdiv(R, 8), 16)           # aim for >= ~8 steps

    rows = min(rows_1m, max(rows_half, rows_8steps))
    if rows >= R:
        return R  # single full-extent block (valid: equals full array dim)

    # Prefer an even number of grid steps so v7x's two TensorCores each get
    # the same share of the stream.
    steps = pl.cdiv(R, rows)
    if steps % 2 == 1:
        alt = _round_up(pl.cdiv(R, steps + 1), 16)
        if 16 <= alt < R and pl.cdiv(R, alt) % 2 == 0:
            rows = alt
    return rows


def snake_old(x, a):
    """Apply Snake_Old activation: y = x + (1/a) * sin(x*a)**2.

    Args:
      x: array of shape (..., T)
      a: array of shape (T,) — trainable frequency parameter (broadcast over
         the last dim, exactly as the PyTorch module's `self.a` broadcasts).
    Returns:
      array of the same shape/dtype as x.
    """
    orig_shape = x.shape
    T = orig_shape[-1]
    assert a.shape == (T,), f"a must have shape ({T},), got {a.shape}"

    x2d = x.reshape(-1, T)
    R0 = x2d.shape[0]

    # Fold k rows into the lane axis when T is not a multiple of 128 so the
    # output stays lane-dense (biggest single lever for elementwise stores).
    k = _choose_fold(R0, T)
    if k > 1:
        x2d = x2d.reshape(R0 // k, k * T)
    R, W = x2d.shape

    # Params in exact f32 regardless of activation dtype. No epsilon: the
    # PyTorch Snake_Old.forward divides by `a` directly (unlike Snake).
    a32 = a.astype(jnp.float32)
    if k > 1:
        a32 = jnp.tile(a32, k)
    params = jnp.stack([a32, 1.0 / a32], axis=0)  # (2, W) f32: [a, 1/a]

    tile_r = _choose_tile_rows(R, W, x2d.dtype.itemsize)
    grid = (pl.cdiv(R, tile_r),)

    out = pl.pallas_call(
        _snake_old_kernel,
        out_shape=jax.ShapeDtypeStruct((R, W), x2d.dtype),
        grid=grid,
        in_specs=[
            pl.BlockSpec((tile_r, W), lambda i: (i, 0)),  # x tile (streamed)
            pl.BlockSpec((2, W), lambda i: (0, 0)),       # [a; 1/a] (resident)
        ],
        out_specs=pl.BlockSpec((tile_r, W), lambda i: (i, 0)),
        compiler_params=pltpu.CompilerParams(
            # Row tiles are independent -> shard the grid across both TCs on v7x.
            dimension_semantics=("parallel",),
        ),
    )(x2d, params)

    return out.reshape(orig_shape)


def _reference(x, a):
    return x + (1.0 / a) * jnp.sin(x * a) ** 2


if __name__ == "__main__":
    key = jax.random.PRNGKey(0)
    kx, ka, kx2, ka2, kx3, ka3 = jax.random.split(key, 6)

    # 1) Small shape consistent with the module: (B, C, T), in_features == T.
    B, C, T = 2, 4, 128
    x = jax.random.normal(kx, (B, C, T), dtype=jnp.float32)
    # Snake_Old default init: a ~ Exponential(rate=0.1) == 10 * Exponential(1).
    a = 10.0 * jax.random.exponential(ka, (T,), dtype=jnp.float32)
    y = jax.block_until_ready(snake_old(x, a))
    assert y.shape == x.shape and y.dtype == x.dtype
    assert jnp.allclose(y, _reference(x, a), atol=1e-5, rtol=1e-5), \
        "mismatch vs reference (small shape)"

    # 2) T not a multiple of 128 -> exercises the row-folding (lane-dense) path.
    B2, C2, T2 = 2, 8, 96
    x2 = jax.random.normal(kx2, (B2, C2, T2), dtype=jnp.float32)
    a2 = 10.0 * jax.random.exponential(ka2, (T2,), dtype=jnp.float32)
    y2 = jax.block_until_ready(snake_old(x2, a2))
    assert jnp.allclose(y2, _reference(x2, a2), atol=1e-5, rtol=1e-5), \
        "mismatch vs reference (folded-lane shape)"

    # 3) Larger shape -> multi-step, even-length, pipelined grid path.
    B3, C3, T3 = 8, 256, 256  # R = 2048 rows -> 4 tiles of 512 rows (512 KiB each)
    x3 = jax.random.normal(kx3, (B3, C3, T3), dtype=jnp.float32)
    a3 = 10.0 * jax.random.exponential(ka3, (T3,), dtype=jnp.float32)
    y3 = jax.block_until_ready(snake_old(x3, a3))
    assert jnp.allclose(y3, _reference(x3, a3), atol=1e-5, rtol=1e-5), \
        "mismatch vs reference (tiled shape)"

    print("KERNEL_OK")
</pallas_src>

<mosaic_0001>
module attributes {stable_mosaic.version = 11 : i64} {
  func.func @_snake_old_kernel(%arg0: i32, %arg1: memref<8x128xf32, #tpu.memory_space<vmem>>, %arg2: memref<2x128xf32, #tpu.memory_space<vmem>>, %arg3: memref<8x128xf32, #tpu.memory_space<vmem>>) attributes {dimension_semantics = [#tpu.dimension_semantics<parallel>], iteration_bounds = array<i64: 1>, scalar_prefetch = 0 : i64, scratch_operands = 0 : i64, tpu.core_type = #tpu.core_type<tc>, window_params = [{transform_indices = @transform_0, window_bounds = array<i64: 8, 128>}, {pipeline_mode = #tpu.pipeline_mode<synchronous>, transform_indices = @transform_1, window_bounds = array<i64: 2, 128>}, {transform_indices = @transform_2, window_bounds = array<i64: 8, 128>}]} {
    %c0 = arith.constant 0 : index
    %c0_0 = arith.constant 0 : index
    %0 = vector.load %arg1[%c0, %c0_0] : memref<8x128xf32, #tpu.memory_space<vmem>>, vector<8x128xf32>
    %c0_1 = arith.constant 0 : index
    %c0_2 = arith.constant 0 : index
    %1 = vector.load %arg2[%c0_1, %c0_2] : memref<2x128xf32, #tpu.memory_space<vmem>>, vector<1x128xf32>
    %2 = vector.shape_cast %1 : vector<1x128xf32> to vector<128xf32>
    %c1 = arith.constant 1 : index
    %c0_3 = arith.constant 0 : index
    %3 = vector.load %arg2[%c1, %c0_3] : memref<2x128xf32, #tpu.memory_space<vmem>>, vector<1x128xf32>
    %4 = vector.shape_cast %3 : vector<1x128xf32> to vector<128xf32>
    %5 = vector.shape_cast %2 : vector<128xf32> to vector<1x128xf32>
    %6 = vector.broadcast %5 : vector<1x128xf32> to vector<8x128xf32>
    %7 = arith.mulf %0, %6 : vector<8x128xf32>
    %8 = math.sin %7 : vector<8x128xf32>
    %9 = arith.mulf %8, %8 : vector<8x128xf32>
    %10 = vector.shape_cast %4 : vector<128xf32> to vector<1x128xf32>
    %11 = vector.broadcast %10 : vector<1x128xf32> to vector<8x128xf32>
    %12 = arith.mulf %11, %9 : vector<8x128xf32>
    %13 = arith.addf %0, %12 : vector<8x128xf32>
    %c0_4 = arith.constant 0 : index
    %c0_5 = arith.constant 0 : index
    %14 = vector.load %arg3[%c0_4, %c0_5] : memref<8x128xf32, #tpu.memory_space<vmem>>, vector<8x128xf32>
    tpu.vector_store %arg3[%c0_4, %c0_5], %13 {strides = array<i32>} : memref<8x128xf32, #tpu.memory_space<vmem>>, vector<8x128xf32>,
    return
  }
  func.func @transform_0(%arg0: i32) -> (i32, i32) {
    %c0_i32 = arith.constant 0 : i32
    %c0_i32_0 = arith.constant 0 : i32
    return %arg0, %c0_i32 : i32, i32
  }
  func.func @transform_1(%arg0: i32) -> (i32, i32) {
    %c0_i32 = arith.constant 0 : i32
    %c0_i32_0 = arith.constant 0 : i32
    %c0_i32_1 = arith.constant 0 : i32
    return %c0_i32, %c0_i32_0 : i32, i32
  }
  func.func @transform_2(%arg0: i32) -> (i32, i32) {
    %c0_i32 = arith.constant 0 : i32
    %c0_i32_0 = arith.constant 0 : i32
    return %arg0, %c0_i32 : i32, i32
  }
}

</mosaic_0001>

<llo_original>
// kernel: tpu_custom_call.1
$region0: #{tpu_custom_call.1}
  #allocation0 [shape = 'u32[]', space=smem, size = 0x4, offset = 0x4, fixed_abs, tag = 'smem constant byte address 0x4 - core index']
  #allocation1 [shape = 'u32[144,128]{1,0:T(1,128)}', space=vmem, size = 0x12000, scoped, tag = 'internal scratch']
  %s0 = inlined_call_operand.hbm [shape: f32[8,128], index: 0, kind: input, shape index: {}]
  %s1 = inlined_call_operand.hbm [shape: f32[2,128], index: 1, kind: input, shape index: {}]
  %s2 = inlined_call_operand.hbm [shape: f32[8,128], index: 2, kind: output, shape index: {}]
  %s3 = sld [smem:[#allocation0]]
  $region26: #{tpu_custom_call.1} parent=0
    _
  %s5 = ssub.s32 1, %s3
  %s6 = scalar_select 0, %s5, %s3
  $region1: #{tpu_custom_call.1} parent=0
    #allocation2 [shape = 'u8[4096]{0}', space=vmem, size = 0x1000, scoped, tag = 'input window, operand 0, single buffered']
    #allocation3 [shape = 's32[1]{0}', space=sflag, size = 0x4, scoped, tag = 'scoped memory for tpu_custom_call.1']
    #allocation4 [shape = 's32[1]{0}', space=sflag, size = 0x4, scoped, tag = 'scoped memory for tpu_custom_call.1']
    #allocation5 [shape = 'u8[1024]{0}', space=vmem, size = 0x400, scoped, tag = 'input window, operand 1, single buffered']
    #allocation6 [shape = 's32[1]{0}', space=sflag, size = 0x4, scoped, tag = 'scoped memory for tpu_custom_call.1']
    #allocation7 [shape = 'u8[4096]{0}', space=vmem, size = 0x1000, scoped, tag = 'output window, operand 0, single buffered']
    %7 = vsyncpa [#allocation3], 0
    %8 = vsyncpa [#allocation6], 0
    %9 = vsyncpa [#allocation4], 0
    // Predicated region
    $region2: #{tpu_custom_call.1} parent=1 // pred_check
      _
    $region3: #{tpu_custom_call.1} parent=1 // pred_check_branch
      %11 = sbr.rel (0) target = $region5
    $region4: #{tpu_custom_call.1} parent=1 // pred_region
      %s13 = ssub.s32 128, 128
      %14 = vsyncadd [#allocation3], %s13
      %s16 = sshll.u32 [#allocation2], 4
      %s17 = int_to_ptr.vmem [resolvable:$true] %s16
      %19 = dma.hbm_to_vmem [thread:$0]  %s0, 128, %s17, [#allocation3]
    $region5: #{tpu_custom_call.1} parent=1 // pred_fallthru
      _
    // Predicated region
    $region6: #{tpu_custom_call.1} parent=1 // pred_check
      _
    $region7: #{tpu_custom_call.1} parent=1 // pred_check_branch
      %21 = sbr.rel (0) target = $region9
    $region8: #{tpu_custom_call.1} parent=1 // pred_region
      %s23 = ssub.s32 32, 32
      %24 = vsyncadd [#allocation6], %s23
      %s26 = sshll.u32 [#allocation5], 4
      %s27 = int_to_ptr.vmem [resolvable:$true] %s26
      %29 = dma.hbm_to_vmem [thread:$0]  %s1, 32, %s27, [#allocation6]
    $region9: #{tpu_custom_call.1} parent=1 // pred_fallthru
      _
    // Predicated region
    $region10: #{tpu_custom_call.1} parent=1 // pred_check
      _
    $region11: #{tpu_custom_call.1} parent=1 // pred_check_branch
      %31 = sbr.rel (0) target = $region13
    $region12: #{tpu_custom_call.1} parent=1 // pred_region
      %32 = dma.done [#allocation3], 128
    $region13: #{tpu_custom_call.1} parent=1 // pred_fallthru
      _
    // Predicated region
    $region14: #{tpu_custom_call.1} parent=1 // pred_check
      _
    $region15: #{tpu_custom_call.1} parent=1 // pred_check_branch
      %34 = sbr.rel (0) target = $region17
    $region16: #{tpu_custom_call.1} parent=1 // pred_region
      %35 = dma.done [#allocation6], 32
    $region17: #{tpu_custom_call.1} parent=1 // pred_fallthru
      _
    %v36 = vld [vmem:[#allocation2] sm:$0xff]
    %v37 = vld [vmem:[#allocation5] sm:$0x1]
    %v38 = vld [vmem:[#allocation5 + $0x1] sm:$0x1]
    %v39 = vlaneseq
    %v40 = vshrl.u32 %v39, 7
    %v41 = vsub.s32 0, %v40
    %v42 = vrot.slane %v37, %v41
    %v43 = vmul.f32 %v36, %v42
    %v44 = vand.u32 2147483647, %v43
    %vm45 = vcmp.le.f32.partialorder %v44, 0.7853982
    %vm46 = vcmp.lt.s32.totalorder %v43, 0
    %v47 = vand.u32 %v43, 2139095040
    %v48 = vshrl.u32 %v47, 23
    %v49 = vsub.s32 %v48, 127
    %v50 = vand.u32 2147483647, %v43
    %v51 = vand.u32 %v50, 8388607
    %v52 = vor.u32 %v51, 8388608
    %v53 = vsub.s32 0, %v52
    %v54 = vadd.s32 %v49, 1
    %vm55 = vcmp.gt.s32.totalorder %v54, 0
    %v56 = vsel %vm55, %v54, 0
    %v57 = vshrl.u32 %v56, 5
    %v58 = vand.u32 %v56, 31
    %v59 = vsub.s32 32, %v58
    %v60 = vshrl.u32 683565275, %v59
    %v61 = vshll.u32 683565275, %v58
    %v62 = vshrl.u32 2475754826, %v59
    %v63 = vor.u32 %v61, %v62
    %v64 = vshll.u32 2475754826, %v58
    %v65 = vshrl.u32 2131351028, %v59
    %v66 = vor.u32 %v64, %v65
    %v67 = vshll.u32 2131351028, %v58
    %v68 = vshrl.u32 2102212464, %v59
    %v69 = vor.u32 %v67, %v68
    %v70 = vshll.u32 2102212464, %v58
    %v71 = vshrl.u32 920167782, %v59
    %v72 = vor.u32 %v70, %v71
    %v73 = vshll.u32 920167782, %v58
    %v74 = vshrl.u32 1326507024, %v59
    %v75 = vor.u32 %v73, %v74
    %vm76 = vcmp.lt.s32.totalorder %v57, 1
    %vm77 = vcmp.lt.s32.totalorder %v57, 2
    %vm78 = vcmp.lt.s32.totalorder %v57, 3
    %vm79 = vcmp.lt.s32.totalorder %v57, 4
    %v80 = vsel %vm76, %v60, %v63
    %v81 = vsel %vm79, %v69, 2102212464
    %v82 = vsel %vm78, %v66, %v81
    %v83 = vsel %vm77, %v80, %v82
    %v84 = vsel %vm76, %v63, %v66
    %v85 = vsel %vm79, %v72, 920167782
    %v86 = vsel %vm78, %v69, %v85
    %v87 = vsel %vm77, %v84, %v86
    %v88 = vsel %vm76, %v66, %v69
    %v89 = vsel %vm79, %v75, 1326507024
    %v90 = vsel %vm78, %v72, %v89
    %v91 = vsel %vm77, %v88, %v90
    %v92 = vshll.u32 %v52, 8
    %v93 = vmul.u32.u64.compose %v92, %v91
    %v94 = vextract.low.u32 %v93
    %v95 = vextract.high.u32 %v93
    %v96 = vmul.u32.u64.compose %v92, %v87
    %v97 = vextract.low.u32 %v96
    %v98 = vextract.high.u32 %v96
    %v99 = vmul.u32 %v92, %v83
    %v100 = vadd.s32 %v95, %v97
    %vm101 = vc.u32 %v95, %v97
    %v102 = vadd.s32 %v98, 1
    %v103 = vsel %vm101, %v102, %v98
    %v104 = vadd.s32 %v99, %v103
    %v105 = vadd.s32 %v104, 536870912
    %v106 = vshrl.u32 %v105, 30
    %v107 = vshll.u32 %v106, 30
    %v108 = vsub.s32 %v104, %v107
    %vm109 = vcmp.lt.s32.totalorder %v108, 0
    %v110 = vsub.s32 0, %v108
    %v111 = vsel %vm109, %v110, %v108
    %v112 = vclz %v111
    %v113 = vsub.s32 %v112, 2
    %vm114 = vcmp.gt.s32.totalorder 0, %v113
    %v115 = vsel %vm114, 0, %v113
    %v116 = vsub.s32 32, %v115
    %v117 = vshll.u32 %v108, %v115
    %v118 = vshrl.u32 %v100, %v116
    %v119 = vor.u32 %v117, %v118
    %v120 = vsub.s32 4294967266, %v115
    %v121 = vadd.s32 %v120, 127
    %v122 = vshll.u32 %v121, 23
    %v123 = vor.u32 4788187, %v122
    %v124 = vand.u32 2147483647, %v123
    %v126 = vcvt.s32.f32 %v119
    %v127 = vmul.f32 %v126, %v124
    %v128 = vxor.u32 %v127, 2147483648
    %v129 = vsel %vm46, %v128, %v127
    %v130 = vsub.s32 4, %v106
    %v131 = vsel %vm46, %v130, %v106
    %v132 = vsel %vm45, %v43, %v129
    %v133 = vsel %vm45, 0, %v131
    %v134 = vcosq.f32.pop %v132
    %v135 = vsinq.f32.pop %v132
    %vm136 = vweird.f32 %v43
    %v137 = vadd.s32 %v133, 3
    %v138 = vand.u32 %v137, 3
    %vm139 = vcmp.lt.s32.totalorder %v138, 2
    %vm140 = vcmp.eq.s32.totalorder %v138, 0
    %v141 = vxor.u32 %v135, 2147483648
    %v142 = vsel %vm140, %v134, %v141
    %vm143 = vcmp.eq.s32.totalorder %v138, 2
    %v144 = vxor.u32 %v134, 2147483648
    %v145 = vsel %vm143, %v144, %v135
    %v146 = vsel %vm139, %v142, %v145
    %v147 = vsel %vm136, nan, %v146
    %v148 = vmul.f32 %v147, %v147
    %v149 = vlaneseq
    %v150 = vshrl.u32 %v149, 7
    %v151 = vsub.s32 0, %v150
    %v152 = vrot.slane %v38, %v151
    %v153 = vmul.f32 %v152, %v148
    %v154 = vadd.f32 %v36, %v153
    %155 = vst [vmem:[#allocation7] sm:$0xff] %v154
    // Predicated region
    $region18: #{tpu_custom_call.1} parent=1 // pred_check
      _
    $region19: #{tpu_custom_call.1} parent=1 // pred_check_branch
      %157 = sbr.rel (0) target = $region21
    $region20: #{tpu_custom_call.1} parent=1 // pred_region
      %s159 = ssub.s32 128, 128
      %160 = vsyncadd [#allocation4], %s159
      %s162 = sshll.u32 [#allocation7], 4
      %s163 = int_to_ptr.vmem [resolvable:$true] %s162
      %165 = dma.vmem_to_hbm [thread:$0]  %s163, 128, %s2, [#allocation4]
    $region21: #{tpu_custom_call.1} parent=1 // pred_fallthru
      _
    // Predicated region
    $region22: #{tpu_custom_call.1} parent=1 // pred_check
      _
    $region23: #{tpu_custom_call.1} parent=1 // pred_check_branch
      %167 = sbr.rel (0) target = $region25
    $region24: #{tpu_custom_call.1} parent=1 // pred_region
      %168 = dma.done [#allocation4], 128
    $region25: #{tpu_custom_call.1} parent=1 // pred_fallthru
      _
    %169 = vsyncpa [#allocation3], 1
    %170 = vsyncpa [#allocation6], 1
    %171 = vsyncpa [#allocation4], 1

</llo_original>
